<compile_context>
chip_gen: v6e
topology: v6e:2x2x1
jax: 0.10.0
libtpu: 0.0.40
codegen_flags: <defaults>
</compile_context>

<pallas_src>
import functools
import math

import jax
import jax.numpy as jnp
from jax.experimental import pallas as pl
from jax.experimental.pallas import tpu as pltpu

NEG_SLOPE = 0.01  # torch.nn.functional.leaky_relu default


def _round_up(n, m):
    return ((n + m - 1) // m) * m


# --------------------------------------------------------------------------- #
# Kernel
# --------------------------------------------------------------------------- #
def _make_fused_mlp_kernel(out_widths, compute_dtype):
    """refs = (x, w0, ..., w_{L-1}, biases, out). Everything stays in VMEM."""
    n_layers = len(out_widths)

    def kernel(x_ref, *refs):
        w_refs = refs[:n_layers]
        b_ref = refs[n_layers]          # stacked biases: (n_layers, Dmax)
        o_ref = refs[n_layers + 1]

        h = x_ref[...].astype(compute_dtype)
        for i, dout in enumerate(out_widths):
            # MXU matmul with f32 accumulation.
            y = jnp.dot(h, w_refs[i][...], preferred_element_type=jnp.float32)
            # Bias-add + leaky_relu in f32 on the VPU (free under MXU cadence).
            y = y + b_ref[i:i + 1, :dout].astype(jnp.float32)
            y = jnp.where(y > 0, y, NEG_SLOPE * y)   # leaky_relu, EVERY layer
            h = y if i == n_layers - 1 else y.astype(compute_dtype)
        o_ref[...] = h.astype(o_ref.dtype)

    return kernel


# --------------------------------------------------------------------------- #
# Parameter init (mimics torch.nn.Linear: U(-k, k), k = 1/sqrt(fan_in))
# --------------------------------------------------------------------------- #
def init_params(key, in_dim, out_dim, n_hidden_layers, n_hidden_layer_neurons,
                param_dtype=jnp.bfloat16):
    """Returns (params, raw_params).

    params = (tuple_of_padded_weights, stacked_biases)  -> fed to the kernel
      weight i : (din_pad, dout_pad) param_dtype, zero padded
      biases   : (n_layers, Dmax)    param_dtype, zero padded
    raw_params[i] = (W (din, dout) f32, b (dout,) f32)   -> pure-JAX reference
    """
    dims = [in_dim] + [n_hidden_layer_neurons] * n_hidden_layers + [out_dim]
    # Pad only the *internal* (hidden) widths to 128; keep in_dim / out_dim
    # exact so x and the output need no wrapper-side pad / slice.
    pdims = [dims[0]] + [_round_up(d, 128) for d in dims[1:-1]] + [dims[-1]]

    weights_pad, raw = [], []
    for i in range(len(dims) - 1):
        din, dout = dims[i], dims[i + 1]
        pdin, pdout = pdims[i], pdims[i + 1]
        key, kw, kb = jax.random.split(key, 3)
        bound = 1.0 / math.sqrt(din)
        w = jax.random.uniform(kw, (din, dout), jnp.float32, -bound, bound)
        b = jax.random.uniform(kb, (dout,), jnp.float32, -bound, bound)
        raw.append((w, b))
        w_p = jnp.zeros((pdin, pdout), param_dtype).at[:din, :dout].set(
            w.astype(param_dtype))
        weights_pad.append(w_p)

    n_layers = len(dims) - 1
    dmax = _round_up(max(pdims[1:]), 128)
    b_all = jnp.zeros((n_layers, dmax), param_dtype)
    for i, (_, b) in enumerate(raw):
        b_all = b_all.at[i, :b.shape[0]].set(b.astype(param_dtype))

    return (tuple(weights_pad), b_all), raw


# --------------------------------------------------------------------------- #
# VMEM budget (explicit, per review; conservative if single-buffer is ignored)
# --------------------------------------------------------------------------- #
def _vmem_limit_bytes(weights, biases, tb, in_dim, out_dim):
    def tile(r, c, itemsize):
        return _round_up(r, 8) * _round_up(c, 128) * itemsize

    w_bytes = sum(tile(w.shape[0], w.shape[1], w.dtype.itemsize) for w in weights)
    b_bytes = tile(biases.shape[0], biases.shape[1], biases.dtype.itemsize)
    max_w = max(w.shape[1] for w in weights)
    io = 2 * tile(tb, in_dim, 4) + 2 * tile(tb, out_dim, 4)   # double-buffered x / out
    act = 4 * tile(tb, max_w, 4)                              # f32 intermediates headroom
    need = 2 * (w_bytes + b_bytes) + io + act + (2 << 20)
    # TODO(synk): configurations whose `need` approaches v7x's 64 MiB physical
    # VMEM must switch to streaming weight K/N tiles from HBM
    # (memory_space=pl.ANY + pltpu.emit_pipeline) instead of keeping every
    # weight resident.
    return min(max(need, 16 << 20), 128 << 20)


# --------------------------------------------------------------------------- #
# Forward
# --------------------------------------------------------------------------- #
@functools.partial(jax.jit, static_argnames=("batch_tile", "single_buffer_weights"))
def _forward(x, params, *, batch_tile, single_buffer_weights):
    weights, biases = params
    B, in_dim = x.shape
    out_dim = int(weights[-1].shape[1])
    out_widths = tuple(int(w.shape[1]) for w in weights)
    compute_dtype = weights[0].dtype

    # Tiny-batch guard (sublane granularity is 8 rows).
    orig_B = B
    if B < 8:
        x = jnp.pad(x, ((0, 8 - B), (0, 0)))
        B = 8

    tb = max(8, min(_round_up(batch_tile, 8), _round_up(B, 8)))
    grid = (pl.cdiv(B, tb),)

    weight_mode = pl.Buffered(1) if single_buffer_weights else None
    in_specs = [pl.BlockSpec((tb, in_dim), lambda i: (i, 0))]
    for w in weights:
        in_specs.append(
            pl.BlockSpec(w.shape, lambda i: (0, 0), pipeline_mode=weight_mode))
    in_specs.append(
        pl.BlockSpec(biases.shape, lambda i: (0, 0), pipeline_mode=weight_mode))

    out = pl.pallas_call(
        _make_fused_mlp_kernel(out_widths, compute_dtype),
        out_shape=jax.ShapeDtypeStruct((B, out_dim), x.dtype),
        grid=grid,
        in_specs=in_specs,
        out_specs=pl.BlockSpec((tb, out_dim), lambda i: (i, 0)),
        compiler_params=pltpu.CompilerParams(
            dimension_semantics=("parallel",),
            vmem_limit_bytes=_vmem_limit_bytes(weights, biases, tb, in_dim, out_dim),
        ),
    )(x, *weights, biases)

    return out[:orig_B] if orig_B != B else out


_SINGLE_BUFFER_WEIGHTS = True  # flipped off if this build rejects pl.Buffered(1)


def neural_net_forward(x, params, *, batch_tile=256):
    """Fused MLP forward. x: (B, in_dim) float32; params from init_params()."""
    global _SINGLE_BUFFER_WEIGHTS
    if _SINGLE_BUFFER_WEIGHTS:
        try:
            return _forward(x, params, batch_tile=batch_tile,
                            single_buffer_weights=True)
        except Exception:
            # Fall back to default (double-buffered) resident weights.
            _SINGLE_BUFFER_WEIGHTS = False
    return _forward(x, params, batch_tile=batch_tile, single_buffer_weights=False)


# --------------------------------------------------------------------------- #
# Self-test
# --------------------------------------------------------------------------- #
if __name__ == "__main__":
    key = jax.random.PRNGKey(0)
    in_dim, out_dim = 16, 8
    n_hidden_layers, n_hidden_layer_neurons = 2, 100   # 100 -> exercises 128-padding

    kx1, kx2, kp = jax.random.split(key, 3)

    # Same raw weights for both precisions (same key).
    params_f32, raw = init_params(kp, in_dim, out_dim, n_hidden_layers,
                                  n_hidden_layer_neurons, param_dtype=jnp.float32)
    params_bf16, _ = init_params(kp, in_dim, out_dim, n_hidden_layers,
                                 n_hidden_layer_neurons, param_dtype=jnp.bfloat16)

    def reference(xv):
        h = xv
        for w, b in raw:
            y = h @ w + b
            h = jnp.where(y > 0, y, NEG_SLOPE * y)   # leaky_relu on every layer
        return h

    # 1) Small batch (module-sized shapes), f32 params: exact check.
    x_small = jax.random.normal(kx1, (8, in_dim), jnp.float32)
    out_small = neural_net_forward(x_small, params_f32)
    jax.block_until_ready(out_small)
    assert out_small.shape == (8, out_dim)
    assert jnp.allclose(out_small, reference(x_small), atol=1e-5, rtol=1e-5)

    # 2) Larger batch: exercises the pipelined batch grid (256-row tiles,
    #    partial last tile handled in-kernel -- no wrapper pad / slice).
    x_big = jax.random.normal(kx2, (1000, in_dim), jnp.float32)
    out_big = neural_net_forward(x_big, params_f32, batch_tile=256)
    jax.block_until_ready(out_big)
    assert out_big.shape == (1000, out_dim)
    assert jnp.allclose(out_big, reference(x_big), atol=1e-5, rtol=1e-5)

    # 3) bf16 weights / activations with f32 accumulation (looser tolerance).
    out_bf16 = neural_net_forward(x_big, params_bf16, batch_tile=256)
    jax.block_until_ready(out_bf16)
    assert out_bf16.shape == (1000, out_dim)
    assert jnp.allclose(out_bf16, reference(x_big), atol=5e-2, rtol=5e-2)

    print("KERNEL_OK")
</pallas_src>

<mosaic_0001>
module attributes {stable_mosaic.version = 11 : i64} {
  func.func @kernel(%arg0: i32, %arg1: memref<8x16xf32, #tpu.memory_space<vmem>>, %arg2: memref<16x128xf32, #tpu.memory_space<vmem>>, %arg3: memref<128x128xf32, #tpu.memory_space<vmem>>, %arg4: memref<128x8xf32, #tpu.memory_space<vmem>>, %arg5: memref<3x128xf32, #tpu.memory_space<vmem>>, %arg6: memref<8x8xf32, #tpu.memory_space<vmem>>) attributes {dimension_semantics = [#tpu.dimension_semantics<parallel>], iteration_bounds = array<i64: 1>, scalar_prefetch = 0 : i64, scratch_operands = 0 : i64, tpu.core_type = #tpu.core_type<tc>, window_params = [{transform_indices = @transform_0, window_bounds = array<i64: 8, 16>}, {pipeline_mode = #tpu.pipeline_mode<synchronous>, transform_indices = @transform_1, window_bounds = array<i64: 16, 128>}, {pipeline_mode = #tpu.pipeline_mode<synchronous>, transform_indices = @transform_2, window_bounds = array<i64: 128, 128>}, {pipeline_mode = #tpu.pipeline_mode<synchronous>, transform_indices = @transform_3, window_bounds = array<i64: 128, 8>}, {pipeline_mode = #tpu.pipeline_mode<synchronous>, transform_indices = @transform_4, window_bounds = array<i64: 3, 128>}, {transform_indices = @transform_5, window_bounds = array<i64: 8, 8>}]} {
    %c0 = arith.constant 0 : index
    %c0_0 = arith.constant 0 : index
    %0 = vector.load %arg1[%c0, %c0_0] : memref<8x16xf32, #tpu.memory_space<vmem>>, vector<8x16xf32>
    %c0_1 = arith.constant 0 : index
    %c0_2 = arith.constant 0 : index
    %1 = vector.load %arg2[%c0_1, %c0_2] : memref<16x128xf32, #tpu.memory_space<vmem>>, vector<16x128xf32>
    %cst = arith.constant dense<0.000000e+00> : vector<8x128xf32>
    %2 = tpu.matmul %0, %1, %cst {dimension_numbers = #tpu.dot_dimension_numbers<[1], [0], [0], [1], [0, 0, 1, 1], [], []>} : vector<8x16xf32>, vector<16x128xf32>, vector<8x128xf32> -> vector<8x128xf32>
    %c0_3 = arith.constant 0 : index
    %c0_4 = arith.constant 0 : index
    %3 = vector.load %arg5[%c0_3, %c0_4] : memref<3x128xf32, #tpu.memory_space<vmem>>, vector<1x128xf32>
    %4 = vector.broadcast %3 : vector<1x128xf32> to vector<8x128xf32>
    %5 = arith.addf %2, %4 : vector<8x128xf32>
    %cst_5 = arith.constant 0.000000e+00 : f32
    %6 = vector.broadcast %cst_5 : f32 to vector<8x128xf32>
    %7 = arith.cmpf ogt, %5, %6 : vector<8x128xf32>
    %cst_6 = arith.constant 0.00999999977 : f32
    %8 = vector.broadcast %cst_6 : f32 to vector<8x128xf32>
    %9 = arith.mulf %8, %5 : vector<8x128xf32>
    %10 = arith.select %7, %5, %9 : vector<8x128xi1>, vector<8x128xf32>
    %c0_7 = arith.constant 0 : index
    %c0_8 = arith.constant 0 : index
    %11 = vector.load %arg3[%c0_7, %c0_8] : memref<128x128xf32, #tpu.memory_space<vmem>>, vector<128x128xf32>
    %cst_9 = arith.constant dense<0.000000e+00> : vector<8x128xf32>
    %12 = tpu.matmul %10, %11, %cst_9 {dimension_numbers = #tpu.dot_dimension_numbers<[1], [0], [0], [1], [0, 0, 1, 1], [], []>} : vector<8x128xf32>, vector<128x128xf32>, vector<8x128xf32> -> vector<8x128xf32>
    %c1 = arith.constant 1 : index
    %c0_10 = arith.constant 0 : index
    %13 = vector.load %arg5[%c1, %c0_10] : memref<3x128xf32, #tpu.memory_space<vmem>>, vector<1x128xf32>
    %14 = vector.broadcast %13 : vector<1x128xf32> to vector<8x128xf32>
    %15 = arith.addf %12, %14 : vector<8x128xf32>
    %cst_11 = arith.constant 0.000000e+00 : f32
    %16 = vector.broadcast %cst_11 : f32 to vector<8x128xf32>
    %17 = arith.cmpf ogt, %15, %16 : vector<8x128xf32>
    %cst_12 = arith.constant 0.00999999977 : f32
    %18 = vector.broadcast %cst_12 : f32 to vector<8x128xf32>
    %19 = arith.mulf %18, %15 : vector<8x128xf32>
    %20 = arith.select %17, %15, %19 : vector<8x128xi1>, vector<8x128xf32>
    %c0_13 = arith.constant 0 : index
    %c0_14 = arith.constant 0 : index
    %21 = vector.load %arg4[%c0_13, %c0_14] : memref<128x8xf32, #tpu.memory_space<vmem>>, vector<128x8xf32>
    %cst_15 = arith.constant dense<0.000000e+00> : vector<8x8xf32>
    %22 = tpu.matmul %20, %21, %cst_15 {dimension_numbers = #tpu.dot_dimension_numbers<[1], [0], [0], [1], [0, 0, 1, 1], [], []>} : vector<8x128xf32>, vector<128x8xf32>, vector<8x8xf32> -> vector<8x8xf32>
    %c2 = arith.constant 2 : index
    %c0_16 = arith.constant 0 : index
    %23 = vector.load %arg5[%c2, %c0_16] : memref<3x128xf32, #tpu.memory_space<vmem>>, vector<1x8xf32>
    %24 = vector.broadcast %23 : vector<1x8xf32> to vector<8x8xf32>
    %25 = arith.addf %22, %24 : vector<8x8xf32>
    %cst_17 = arith.constant 0.000000e+00 : f32
    %26 = vector.broadcast %cst_17 : f32 to vector<8x8xf32>
    %27 = arith.cmpf ogt, %25, %26 : vector<8x8xf32>
    %cst_18 = arith.constant 0.00999999977 : f32
    %28 = vector.broadcast %cst_18 : f32 to vector<8x8xf32>
    %29 = arith.mulf %28, %25 : vector<8x8xf32>
    %30 = arith.select %27, %25, %29 : vector<8x8xi1>, vector<8x8xf32>
    %c0_19 = arith.constant 0 : index
    %c0_20 = arith.constant 0 : index
    %31 = vector.load %arg6[%c0_19, %c0_20] : memref<8x8xf32, #tpu.memory_space<vmem>>, vector<8x8xf32>
    tpu.vector_store %arg6[%c0_19, %c0_20], %30 {strides = array<i32>} : memref<8x8xf32, #tpu.memory_space<vmem>>, vector<8x8xf32>,
    return
  }
  func.func @transform_0(%arg0: i32) -> (i32, i32) {
    %c0_i32 = arith.constant 0 : i32
    %c0_i32_0 = arith.constant 0 : i32
    return %arg0, %c0_i32 : i32, i32
  }
  func.func @transform_1(%arg0: i32) -> (i32, i32) {
    %c0_i32 = arith.constant 0 : i32
    %c0_i32_0 = arith.constant 0 : i32
    %c0_i32_1 = arith.constant 0 : i32
    return %c0_i32, %c0_i32_0 : i32, i32
  }
  func.func @transform_2(%arg0: i32) -> (i32, i32) {
    %c0_i32 = arith.constant 0 : i32
    %c0_i32_0 = arith.constant 0 : i32
    %c0_i32_1 = arith.constant 0 : i32
    return %c0_i32, %c0_i32_0 : i32, i32
  }
  func.func @transform_3(%arg0: i32) -> (i32, i32) {
    %c0_i32 = arith.constant 0 : i32
    %c0_i32_0 = arith.constant 0 : i32
    %c0_i32_1 = arith.constant 0 : i32
    return %c0_i32, %c0_i32_0 : i32, i32
  }
  func.func @transform_4(%arg0: i32) -> (i32, i32) {
    %c0_i32 = arith.constant 0 : i32
    %c0_i32_0 = arith.constant 0 : i32
    %c0_i32_1 = arith.constant 0 : i32
    return %c0_i32, %c0_i32_0 : i32, i32
  }
  func.func @transform_5(%arg0: i32) -> (i32, i32) {
    %c0_i32 = arith.constant 0 : i32
    %c0_i32_0 = arith.constant 0 : i32
    return %arg0, %c0_i32 : i32, i32
  }
}

module attributes {stable_mosaic.version = 11 : i64} {
  func.func @kernel(%arg0: i32, %arg1: memref<8x16xf32, #tpu.memory_space<vmem>>, %arg2: memref<16x128xf32, #tpu.memory_space<vmem>>, %arg3: memref<128x128xf32, #tpu.memory_space<vmem>>, %arg4: memref<128x8xf32, #tpu.memory_space<vmem>>, %arg5: memref<3x128xf32, #tpu.memory_space<vmem>>, %arg6: memref<8x8xf32, #tpu.memory_space<vmem>>) attributes {dimension_semantics = [#tpu.dimension_semantics<parallel>], iteration_bounds = array<i64: 1>, scalar_prefetch = 0 : i64, scratch_operands = 0 : i64, tpu.core_type = #tpu.core_type<tc>, window_params = [{transform_indices = @transform_0, window_bounds = array<i64: 8, 16>}, {pipeline_mode = #tpu.pipeline_mode<synchronous>, transform_indices = @transform_1, window_bounds = array<i64: 16, 128>}, {pipeline_mode = #tpu.pipeline_mode<synchronous>, transform_indices = @transform_2, window_bounds = array<i64: 128, 128>}, {pipeline_mode = #tpu.pipeline_mode<synchronous>, transform_indices = @transform_3, window_bounds = array<i64: 128, 8>}, {pipeline_mode = #tpu.pipeline_mode<synchronous>, transform_indices = @transform_4, window_bounds = array<i64: 3, 128>}, {transform_indices = @transform_5, window_bounds = array<i64: 8, 8>}]} {
    %c0 = arith.constant 0 : index
    %c0_0 = arith.constant 0 : index
    %0 = vector.load %arg1[%c0, %c0_0] : memref<8x16xf32, #tpu.memory_space<vmem>>, vector<8x16xf32>
    %c0_1 = arith.constant 0 : index
    %c0_2 = arith.constant 0 : index
    %1 = vector.load %arg2[%c0_1, %c0_2] : memref<16x128xf32, #tpu.memory_space<vmem>>, vector<16x128xf32>
    %cst = arith.constant dense<0.000000e+00> : vector<8x128xf32>
    %2 = tpu.matmul %0, %1, %cst {dimension_numbers = #tpu.dot_dimension_numbers<[1], [0], [0], [1], [0, 0, 1, 1], [], []>} : vector<8x16xf32>, vector<16x128xf32>, vector<8x128xf32> -> vector<8x128xf32>
    %c0_3 = arith.constant 0 : index
    %c0_4 = arith.constant 0 : index
    %3 = vector.load %arg5[%c0_3, %c0_4] : memref<3x128xf32, #tpu.memory_space<vmem>>, vector<1x128xf32>
    %4 = vector.broadcast %3 : vector<1x128xf32> to vector<8x128xf32>
    %5 = arith.addf %2, %4 : vector<8x128xf32>
    %cst_5 = arith.constant 0.000000e+00 : f32
    %6 = vector.broadcast %cst_5 : f32 to vector<8x128xf32>
    %7 = arith.cmpf ogt, %5, %6 : vector<8x128xf32>
    %cst_6 = arith.constant 0.00999999977 : f32
    %8 = vector.broadcast %cst_6 : f32 to vector<8x128xf32>
    %9 = arith.mulf %8, %5 : vector<8x128xf32>
    %10 = arith.select %7, %5, %9 : vector<8x128xi1>, vector<8x128xf32>
    %c0_7 = arith.constant 0 : index
    %c0_8 = arith.constant 0 : index
    %11 = vector.load %arg3[%c0_7, %c0_8] : memref<128x128xf32, #tpu.memory_space<vmem>>, vector<128x128xf32>
    %cst_9 = arith.constant dense<0.000000e+00> : vector<8x128xf32>
    %12 = tpu.matmul %10, %11, %cst_9 {dimension_numbers = #tpu.dot_dimension_numbers<[1], [0], [0], [1], [0, 0, 1, 1], [], []>} : vector<8x128xf32>, vector<128x128xf32>, vector<8x128xf32> -> vector<8x128xf32>
    %c1 = arith.constant 1 : index
    %c0_10 = arith.constant 0 : index
    %13 = vector.load %arg5[%c1, %c0_10] : memref<3x128xf32, #tpu.memory_space<vmem>>, vector<1x128xf32>
    %14 = vector.broadcast %13 : vector<1x128xf32> to vector<8x128xf32>
    %15 = arith.addf %12, %14 : vector<8x128xf32>
    %cst_11 = arith.constant 0.000000e+00 : f32
    %16 = vector.broadcast %cst_11 : f32 to vector<8x128xf32>
    %17 = arith.cmpf ogt, %15, %16 : vector<8x128xf32>
    %cst_12 = arith.constant 0.00999999977 : f32
    %18 = vector.broadcast %cst_12 : f32 to vector<8x128xf32>
    %19 = arith.mulf %18, %15 : vector<8x128xf32>
    %20 = arith.select %17, %15, %19 : vector<8x128xi1>, vector<8x128xf32>
    %c0_13 = arith.constant 0 : index
    %c0_14 = arith.constant 0 : index
    %21 = vector.load %arg4[%c0_13, %c0_14] : memref<128x8xf32, #tpu.memory_space<vmem>>, vector<128x8xf32>
    %cst_15 = arith.constant dense<0.000000e+00> : vector<8x8xf32>
    %22 = tpu.matmul %20, %21, %cst_15 {dimension_numbers = #tpu.dot_dimension_numbers<[1], [0], [0], [1], [0, 0, 1, 1], [], []>} : vector<8x128xf32>, vector<128x8xf32>, vector<8x8xf32> -> vector<8x8xf32>
    %c2 = arith.constant 2 : index
    %c0_16 = arith.constant 0 : index
    %23 = vector.load %arg5[%c2, %c0_16] : memref<3x128xf32, #tpu.memory_space<vmem>>, vector<1x8xf32>
    %24 = vector.broadcast %23 : vector<1x8xf32> to vector<8x8xf32>
    %25 = arith.addf %22, %24 : vector<8x8xf32>
    %cst_17 = arith.constant 0.000000e+00 : f32
    %26 = vector.broadcast %cst_17 : f32 to vector<8x8xf32>
    %27 = arith.cmpf ogt, %25, %26 : vector<8x8xf32>
    %cst_18 = arith.constant 0.00999999977 : f32
    %28 = vector.broadcast %cst_18 : f32 to vector<8x8xf32>
    %29 = arith.mulf %28, %25 : vector<8x8xf32>
    %30 = arith.select %27, %25, %29 : vector<8x8xi1>, vector<8x8xf32>
    %c0_19 = arith.constant 0 : index
    %c0_20 = arith.constant 0 : index
    %31 = vector.load %arg6[%c0_19, %c0_20] : memref<8x8xf32, #tpu.memory_space<vmem>>, vector<8x8xf32>
    tpu.vector_store %arg6[%c0_19, %c0_20], %30 {strides = array<i32>} : memref<8x8xf32, #tpu.memory_space<vmem>>, vector<8x8xf32>,
    return
  }
  func.func @transform_0(%arg0: i32) -> (i32, i32) {
    %c0_i32 = arith.constant 0 : i32
    %c0_i32_0 = arith.constant 0 : i32
    return %arg0, %c0_i32 : i32, i32
  }
  func.func @transform_1(%arg0: i32) -> (i32, i32) {
    %c0_i32 = arith.constant 0 : i32
    %c0_i32_0 = arith.constant 0 : i32
    %c0_i32_1 = arith.constant 0 : i32
    return %c0_i32, %c0_i32_0 : i32, i32
  }
  func.func @transform_2(%arg0: i32) -> (i32, i32) {
    %c0_i32 = arith.constant 0 : i32
    %c0_i32_0 = arith.constant 0 : i32
    %c0_i32_1 = arith.constant 0 : i32
    return %c0_i32, %c0_i32_0 : i32, i32
  }
  func.func @transform_3(%arg0: i32) -> (i32, i32) {
    %c0_i32 = arith.constant 0 : i32
    %c0_i32_0 = arith.constant 0 : i32
    %c0_i32_1 = arith.constant 0 : i32
    return %c0_i32, %c0_i32_0 : i32, i32
  }
  func.func @transform_4(%arg0: i32) -> (i32, i32) {
    %c0_i32 = arith.constant 0 : i32
    %c0_i32_0 = arith.constant 0 : i32
    %c0_i32_1 = arith.constant 0 : i32
    return %c0_i32, %c0_i32_0 : i32, i32
  }
  func.func @transform_5(%arg0: i32) -> (i32, i32) {
    %c0_i32 = arith.constant 0 : i32
    %c0_i32_0 = arith.constant 0 : i32
    return %arg0, %c0_i32 : i32, i32
  }
}

</mosaic_0001>

<llo_original>
// kernel: _forward.1
$region0: #{_forward.1}
  #allocation0 [shape = 'u32[]', space=smem, size = 0x4, offset = 0x4, fixed_abs, tag = 'smem constant byte address 0x4 - core index']
  #allocation1 [shape = 'u32[144,128]{1,0:T(1,128)}', space=vmem, size = 0x12000, scoped, tag = 'internal scratch']
  %s0 = inlined_call_operand.vmem [shape: f32[8,16], index: 0, kind: input, shape index: {}]
  %s1 = inlined_call_operand.hbm [shape: f32[16,128], index: 1, kind: input, shape index: {}]
  %s2 = inlined_call_operand.vmem [shape: f32[128,128], index: 2, kind: input, shape index: {}]
  %s3 = inlined_call_operand.vmem [shape: f32[128,8], index: 3, kind: input, shape index: {}]
  %s4 = inlined_call_operand.vmem [shape: f32[3,128], index: 4, kind: input, shape index: {}]
  %s5 = inlined_call_operand.hbm [shape: f32[8,8], index: 5, kind: output, shape index: {}]
  %s6 = sld [smem:[#allocation0]]
  $region34: #{_forward.1} parent=0
    _
  %s8 = ssub.s32 1, %s6
  %s9 = scalar_select 0, %s8, %s6
  $region1: #{_forward.1} parent=0
    #allocation2 [shape = 'u8[8192]{0}', space=vmem, size = 0x2000, scoped, tag = 'input window, operand 1, single buffered']
    #allocation3 [shape = 's32[1]{0}', space=sflag, size = 0x4, scoped, tag = 'scoped memory for _forward.1']
    #allocation4 [shape = 's32[1]{0}', space=sflag, size = 0x4, scoped, tag = 'scoped memory for _forward.1']
    #allocation5 [shape = 'u8[4096]{0}', space=vmem, size = 0x1000, scoped, tag = 'output window, operand 0, single buffered']
    %10 = vsyncpa [#allocation3], 0
    %11 = vsyncpa [#allocation4], 0
    // Predicated region
    $region2: #{_forward.1} parent=1 // pred_check
      _
    $region3: #{_forward.1} parent=1 // pred_check_branch
      %13 = sbr.rel (0) target = $region5
    $region4: #{_forward.1} parent=1 // pred_region
      _
    $region5: #{_forward.1} parent=1 // pred_fallthru
      _
    // Predicated region
    $region6: #{_forward.1} parent=1 // pred_check
      _
    $region7: #{_forward.1} parent=1 // pred_check_branch
      %15 = sbr.rel (0) target = $region9
    $region8: #{_forward.1} parent=1 // pred_region
      %s17 = ssub.s32 256, 256
      %18 = vsyncadd [#allocation3], %s17
      %s19 = sshll.u32 [#allocation2], 4
      %s20 = int_to_ptr.vmem [resolvable:$true] %s19
      %25 = dma.hbm_to_vmem [thread:$0]  %s1, 256, %s20, [#allocation3], 128, 128, 8
    $region9: #{_forward.1} parent=1 // pred_fallthru
      _
    // Predicated region
    $region10: #{_forward.1} parent=1 // pred_check
      _
    $region11: #{_forward.1} parent=1 // pred_check_branch
      %27 = sbr.rel (0) target = $region13
    $region12: #{_forward.1} parent=1 // pred_region
      _
    $region13: #{_forward.1} parent=1 // pred_fallthru
      _
    // Predicated region
    $region14: #{_forward.1} parent=1 // pred_check
      _
    $region15: #{_forward.1} parent=1 // pred_check_branch
      %29 = sbr.rel (0) target = $region17
    $region16: #{_forward.1} parent=1 // pred_region
      _
    $region17: #{_forward.1} parent=1 // pred_fallthru
      _
    // Predicated region
    $region18: #{_forward.1} parent=1 // pred_check
      _
    $region19: #{_forward.1} parent=1 // pred_check_branch
      %31 = sbr.rel (0) target = $region21
    $region20: #{_forward.1} parent=1 // pred_region
      _
    $region21: #{_forward.1} parent=1 // pred_fallthru
      _
    // Predicated region
    $region22: #{_forward.1} parent=1 // pred_check
      _
    $region23: #{_forward.1} parent=1 // pred_check_branch
      %33 = sbr.rel (0) target = $region25
    $region24: #{_forward.1} parent=1 // pred_region
      %34 = dma.done [#allocation3], 256
    $region25: #{_forward.1} parent=1 // pred_fallthru
      _
    %v35 = vld [vmem:[%s0] sm:$0xff]
    %v36 = vld [vmem:[#allocation2] sm:$0xff]
    %v37 = vld [vmem:[#allocation2 + $0x8] sm:$0xff]
    %v38 = vld [vmem:[%s4] sm:$0x1]
    %v39 = vlaneseq
    %v40 = vshrl.u32 %v39, 7
    %v41 = vsub.s32 0, %v40
    %v42 = vrot.slane %v38, %v41
    %vm43 = vcmask 130048
    %v45 = vsel %vm43, %v35, 0
    %47 = vmatprep.subr.mxu0 0.0
    %48 = vmatpush1.msra.mxu0 0.0
    %49 = vmatprep.subr.mxu0 0.0
    %50 = vmatpush1.msra.mxu0 0.0
    %51 = vmatprep.subr.mxu0 0.0
    %52 = vmatpush1.msra.mxu0 0.0
    %53 = vmatprep.subr.mxu0 0.0
    %54 = vmatpush1.msra.mxu0 0.0
    %55 = vmatprep.subr.mxu0 0.0
    %56 = vmatpush1.msra.mxu0 0.0
    %57 = vmatprep.subr.mxu0 0.0
    %58 = vmatpush1.msra.mxu0 0.0
    %59 = vmatprep.subr.mxu0 0.0
    %60 = vmatpush1.msra.mxu0 0.0
    %61 = vmatprep.subr.mxu0 0.0
    %62 = vmatpush1.msra.mxu0 0.0
    %63 = vmatprep.subr.mxu0 0.0
    %64 = vmatpush1.msra.mxu0 0.0
    %65 = vmatprep.subr.mxu0 0.0
    %66 = vmatpush1.msra.mxu0 0.0
    %67 = vmatprep.subr.mxu0 0.0
    %68 = vmatpush1.msra.mxu0 0.0
    %69 = vmatprep.subr.mxu0 0.0
    %70 = vmatpush1.msra.mxu0 0.0
    %71 = vmatprep.subr.mxu0 0.0
    %72 = vmatpush1.msra.mxu0 0.0
    %73 = vmatprep.subr.mxu0 0.0
    %74 = vmatpush1.msra.mxu0 0.0
    %75 = vmatprep.subr.mxu0 0.0
    %76 = vmatpush1.msra.mxu0 %v37
    %77 = vmatprep.subr.mxu0 0.0
    %78 = vmatpush1.msra.mxu0 %v36
    %79 = vmatprep.subr.mxu0 0.0
    %80 = vmatpush2.msra.mxu0 0.0
    %81 = vmatprep.subr.mxu0 0.0
    %82 = vmatpush2.msra.mxu0 0.0
    %83 = vmatprep.subr.mxu0 0.0
    %84 = vmatpush2.msra.mxu0 0.0
    %85 = vmatprep.subr.mxu0 0.0
    %86 = vmatpush2.msra.mxu0 0.0
    %87 = vmatprep.subr.mxu0 0.0
    %88 = vmatpush2.msra.mxu0 0.0
    %89 = vmatprep.subr.mxu0 0.0
    %90 = vmatpush2.msra.mxu0 0.0
    %91 = vmatprep.subr.mxu0 0.0
    %92 = vmatpush2.msra.mxu0 0.0
    %93 = vmatprep.subr.mxu0 0.0
    %94 = vmatpush2.msra.mxu0 0.0
    %95 = vmatprep.subr.mxu0 0.0
    %96 = vmatpush2.msra.mxu0 0.0
    %97 = vmatprep.subr.mxu0 0.0
    %98 = vmatpush2.msra.mxu0 0.0
    %99 = vmatprep.subr.mxu0 0.0
    %100 = vmatpush2.msra.mxu0 0.0
    %101 = vmatprep.subr.mxu0 0.0
    %102 = vmatpush2.msra.mxu0 0.0
    %103 = vmatprep.subr.mxu0 0.0
    %104 = vmatpush2.msra.mxu0 0.0
    %105 = vmatprep.subr.mxu0 0.0
    %106 = vmatpush2.msra.mxu0 0.0
    %107 = vmatprep.subr.mxu0 0.0
    %108 = vmatpush2.msra.mxu0 0.0
    %109 = vmatprep.subr.mxu0 0.0
    %110 = vmatpush2.msra.mxu0 0.0
    %111 = vmatprep.mubr.f32.mxu0 0.0
    %112 = vmatmul.mubr.f32.gmra.mxu0 %v45
    %v113 = vpop.f32.mrf.mxu0
    %v114 = vadd.f32 %v42, %v113
    %v115 = vpop.f32.mrf.mxu0
    %116 = vdwg.mxu0
    %vm117 = vcmp.gt.f32.partialorder %v114, 0.0
    %v118 = vmul.f32 %v114, 0.01
    %v119 = vsel %vm117, %v114, %v118
    %v120 = vld [vmem:[%s2] sm:$0xff]
    %v121 = vld [vmem:[%s2 + $0x8] sm:$0xff]
    %v122 = vld [vmem:[%s2 + $0x10] sm:$0xff]
    %v123 = vld [vmem:[%s2 + $0x18] sm:$0xff]
    %v124 = vld [vmem:[%s2 + $0x20] sm:$0xff]
    %v125 = vld [vmem:[%s2 + $0x28] sm:$0xff]
    %v126 = vld [vmem:[%s2 + $0x30] sm:$0xff]
    %v127 = vld [vmem:[%s2 + $0x38] sm:$0xff]
    %v128 = vld [vmem:[%s2 + $0x40] sm:$0xff]
    %v129 = vld [vmem:[%s2 + $0x48] sm:$0xff]
    %v130 = vld [vmem:[%s2 + $0x50] sm:$0xff]
    %v131 = vld [vmem:[%s2 + $0x58] sm:$0xff]
    %v132 = vld [vmem:[%s2 + $0x60] sm:$0xff]
    %v133 = vld [vmem:[%s2 + $0x68] sm:$0xff]
    %v134 = vld [vmem:[%s2 + $0x70] sm:$0xff]
    %v135 = vld [vmem:[%s2 + $0x78] sm:$0xff]
    %v136 = vld [vmem:[%s4 + $0x1] sm:$0x1]
    %v137 = vlaneseq
    %v138 = vshrl.u32 %v137, 7
    %v139 = vsub.s32 0, %v138
    %v140 = vrot.slane %v136, %v139
    %141 = vmatprep.subr.mxu0 0.0
    %142 = vmatpush1.msra.mxu0 %v135
    %143 = vmatprep.subr.mxu0 0.0
    %144 = vmatpush1.msra.mxu0 %v134
    %145 = vmatprep.subr.mxu0 0.0
    %146 = vmatpush1.msra.mxu0 %v133
    %147 = vmatprep.subr.mxu0 0.0
    %148 = vmatpush1.msra.mxu0 %v132
    %149 = vmatprep.subr.mxu0 0.0
    %150 = vmatpush1.msra.mxu0 %v131
    %151 = vmatprep.subr.mxu0 0.0
    %152 = vmatpush1.msra.mxu0 %v130
    %153 = vmatprep.subr.mxu0 0.0
    %154 = vmatpush1.msra.mxu0 %v129
    %155 = vmatprep.subr.mxu0 0.0
    %156 = vmatpush1.msra.mxu0 %v128
    %157 = vmatprep.subr.mxu0 0.0
    %158 = vmatpush1.msra.mxu0 %v127
    %159 = vmatprep.subr.mxu0 0.0
    %160 = vmatpush1.msra.mxu0 %v126
    %161 = vmatprep.subr.mxu0 0.0
    %162 = vmatpush1.msra.mxu0 %v125
    %163 = vmatprep.subr.mxu0 0.0
    %164 = vmatpush1.msra.mxu0 %v124
    %165 = vmatprep.subr.mxu0 0.0
    %166 = vmatpush1.msra.mxu0 %v123
    %167 = vmatprep.subr.mxu0 0.0
    %168 = vmatpush1.msra.mxu0 %v122
    %169 = vmatprep.subr.mxu0 0.0
    %170 = vmatpush1.msra.mxu0 %v121
    %171 = vmatprep.subr.mxu0 0.0
    %172 = vmatpush1.msra.mxu0 %v120
    %173 = vmatprep.subr.mxu0 0.0
    %174 = vmatpush2.msra.mxu0 0.0
    %175 = vmatprep.subr.mxu0 0.0
    %176 = vmatpush2.msra.mxu0 0.0
    %177 = vmatprep.subr.mxu0 0.0
    %178 = vmatpush2.msra.mxu0 0.0
    %179 = vmatprep.subr.mxu0 0.0
    %180 = vmatpush2.msra.mxu0 0.0
    %181 = vmatprep.subr.mxu0 0.0
    %182 = vmatpush2.msra.mxu0 0.0
    %183 = vmatprep.subr.mxu0 0.0
    %184 = vmatpush2.msra.mxu0 0.0
    %185 = vmatprep.subr.mxu0 0.0
    %186 = vmatpush2.msra.mxu0 0.0
    %187 = vmatprep.subr.mxu0 0.0
    %188 = vmatpush2.msra.mxu0 0.0
    %189 = vmatprep.subr.mxu0 0.0
    %190 = vmatpush2.msra.mxu0 0.0
    %191 = vmatprep.subr.mxu0 0.0
    %192 = vmatpush2.msra.mxu0 0.0
    %193 = vmatprep.subr.mxu0 0.0
    %194 = vmatpush2.msra.mxu0 0.0
    %195 = vmatprep.subr.mxu0 0.0
    %196 = vmatpush2.msra.mxu0 0.0
    %197 = vmatprep.subr.mxu0 0.0
    %198 = vmatpush2.msra.mxu0 0.0
    %199 = vmatprep.subr.mxu0 0.0
    %200 = vmatpush2.msra.mxu0 0.0
    %201 = vmatprep.subr.mxu0 0.0
    %202 = vmatpush2.msra.mxu0 0.0
    %203 = vmatprep.subr.mxu0 0.0
    %204 = vmatpush2.msra.mxu0 0.0
    %205 = vmatprep.mubr.f32.mxu0 0.0
    %206 = vmatmul.mubr.f32.gmra.mxu0 %v119
    %v207 = vpop.f32.mrf.mxu0
    %v208 = vadd.f32 %v140, %v207
    %v209 = vpop.f32.mrf.mxu0
    %210 = vdwg.mxu0
    %vm211 = vcmp.gt.f32.partialorder %v208, 0.0
    %v212 = vmul.f32 %v208, 0.01
    %v213 = vsel %vm211, %v208, %v212
    %v214 = vld [vmem:[%s3] sm:$0xff]
    %v215 = vld [vmem:[%s3 + $0x8] sm:$0xff]
    %v216 = vld [vmem:[%s3 + $0x10] sm:$0xff]
    %v217 = vld [vmem:[%s3 + $0x18] sm:$0xff]
    %v218 = vld [vmem:[%s3 + $0x20] sm:$0xff]
    %v219 = vld [vmem:[%s3 + $0x28] sm:$0xff]
    %v220 = vld [vmem:[%s3 + $0x30] sm:$0xff]
    %v221 = vld [vmem:[%s3 + $0x38] sm:$0xff]
    %v222 = vld [vmem:[%s3 + $0x40] sm:$0xff]
    %v223 = vld [vmem:[%s3 + $0x48] sm:$0xff]
    %v224 = vld [vmem:[%s3 + $0x50] sm:$0xff]
    %v225 = vld [vmem:[%s3 + $0x58] sm:$0xff]
    %v226 = vld [vmem:[%s3 + $0x60] sm:$0xff]
    %v227 = vld [vmem:[%s3 + $0x68] sm:$0xff]
    %v228 = vld [vmem:[%s3 + $0x70] sm:$0xff]
    %v229 = vld [vmem:[%s3 + $0x78] sm:$0xff]
    %v230 = vld [vmem:[%s4 + $0x2] sm:$0x1]
    %v231 = vlaneseq
    %v232 = vshrl.u32 %v231, 7
    %v233 = vsub.s32 0, %v232
    %v234 = vrot.slane %v230, %v233
    %235 = vmatprep.subr.mxu0 0.0
    %236 = vmatpush1.msra.mxu0 %v229
    %237 = vmatprep.subr.mxu0 0.0
    %238 = vmatpush1.msra.mxu0 %v228
    %239 = vmatprep.subr.mxu0 0.0
    %240 = vmatpush1.msra.mxu0 %v227
    %241 = vmatprep.subr.mxu0 0.0
    %242 = vmatpush1.msra.mxu0 %v226
    %243 = vmatprep.subr.mxu0 0.0
    %244 = vmatpush1.msra.mxu0 %v225
    %245 = vmatprep.subr.mxu0 0.0
    %246 = vmatpush1.msra.mxu0 %v224
    %247 = vmatprep.subr.mxu0 0.0
    %248 = vmatpush1.msra.mxu0 %v223
    %249 = vmatprep.subr.mxu0 0.0
    %250 = vmatpush1.msra.mxu0 %v222
    %251 = vmatprep.subr.mxu0 0.0
    %252 = vmatpush1.msra.mxu0 %v221
    %253 = vmatprep.subr.mxu0 0.0
    %254 = vmatpush1.msra.mxu0 %v220
    %255 = vmatprep.subr.mxu0 0.0
    %256 = vmatpush1.msra.mxu0 %v219
    %257 = vmatprep.subr.mxu0 0.0
    %258 = vmatpush1.msra.mxu0 %v218
    %259 = vmatprep.subr.mxu0 0.0
    %260 = vmatpush1.msra.mxu0 %v217
    %261 = vmatprep.subr.mxu0 0.0
    %262 = vmatpush1.msra.mxu0 %v216
    %263 = vmatprep.subr.mxu0 0.0
    %264 = vmatpush1.msra.mxu0 %v215
    %265 = vmatprep.subr.mxu0 0.0
    %266 = vmatpush1.msra.mxu0 %v214
    %267 = vmatprep.subr.mxu0 0.0
    %268 = vmatpush2.msra.mxu0 0.0
    %269 = vmatprep.subr.mxu0 0.0
    %270 = vmatpush2.msra.mxu0 0.0
    %271 = vmatprep.subr.mxu0 0.0
    %272 = vmatpush2.msra.mxu0 0.0
    %273 = vmatprep.subr.mxu0 0.0
    %274 = vmatpush2.msra.mxu0 0.0
    %275 = vmatprep.subr.mxu0 0.0
    %276 = vmatpush2.msra.mxu0 0.0
    %277 = vmatprep.subr.mxu0 0.0
    %278 = vmatpush2.msra.mxu0 0.0
    %279 = vmatprep.subr.mxu0 0.0
    %280 = vmatpush2.msra.mxu0 0.0
    %281 = vmatprep.subr.mxu0 0.0
    %282 = vmatpush2.msra.mxu0 0.0
    %283 = vmatprep.subr.mxu0 0.0
    %284 = vmatpush2.msra.mxu0 0.0
    %285 = vmatprep.subr.mxu0 0.0
    %286 = vmatpush2.msra.mxu0 0.0
    %287 = vmatprep.subr.mxu0 0.0
    %288 = vmatpush2.msra.mxu0 0.0
    %289 = vmatprep.subr.mxu0 0.0
    %290 = vmatpush2.msra.mxu0 0.0
    %291 = vmatprep.subr.mxu0 0.0
    %292 = vmatpush2.msra.mxu0 0.0
    %293 = vmatprep.subr.mxu0 0.0
    %294 = vmatpush2.msra.mxu0 0.0
    %295 = vmatprep.subr.mxu0 0.0
    %296 = vmatpush2.msra.mxu0 0.0
    %297 = vmatprep.subr.mxu0 0.0
    %298 = vmatpush2.msra.mxu0 0.0
    %299 = vmatprep.mubr.f32.mxu0 0.0
    %300 = vmatmul.mubr.f32.gmra.mxu0 %v213
    %v301 = vpop.f32.mrf.mxu0
    %v302 = vadd.f32 %v234, %v301
    %v303 = vpop.f32.mrf.mxu0
    %304 = vdwg.mxu0
    %vm305 = vcmp.gt.f32.partialorder %v302, 0.0
    %v306 = vmul.f32 %v302, 0.01
    %v307 = vsel %vm305, %v302, %v306
    %vm308 = vcmask 64512
    %309 = vst.msk [vmem:[#allocation5] sm:$0xff] %vm308, %v307
    // Predicated region
    $region26: #{_forward.1} parent=1 // pred_check
      _
    $region27: #{_forward.1} parent=1 // pred_check_branch
      %311 = sbr.rel (0) target = $region29
    $region28: #{_forward.1} parent=1 // pred_region
      %s313 = ssub.s32 128, 128
      %314 = vsyncadd [#allocation4], %s313
      %s316 = sshll.u32 [#allocation5], 4
      %s317 = int_to_ptr.vmem [resolvable:$true] %s316
      %319 = dma.vmem_to_hbm [thread:$0]  %s317, 128, %s5, [#allocation4]
    $region29: #{_forward.1} parent=1 // pred_fallthru
      _
    // Predicated region
    $region30: #{_forward.1} parent=1 // pred_check
      _
    $region31: #{_forward.1} parent=1 // pred_check_branch
      %321 = sbr.rel (0) target = $region33
    $region32: #{_forward.1} parent=1 // pred_region
      %322 = dma.done [#allocation4], 128
    $region33: #{_forward.1} parent=1 // pred_fallthru
      _
    %323 = vsyncpa [#allocation3], 1
    %324 = vsyncpa [#allocation4], 1

// kernel: _forward.1
$region0: #{_forward.1}
  #allocation0 [shape = 'u32[]', space=smem, size = 0x4, offset = 0x4, fixed_abs, tag = 'smem constant byte address 0x4 - core index']
  #allocation1 [shape = 'u32[144,128]{1,0:T(1,128)}', space=vmem, size = 0x12000, scoped, tag = 'internal scratch']
  %s0 = inlined_call_operand.vmem [shape: f32[8,16], index: 0, kind: input, shape index: {}]
  %s1 = inlined_call_operand.hbm [shape: f32[16,128], index: 1, kind: input, shape index: {}]
  %s2 = inlined_call_operand.vmem [shape: f32[128,128], index: 2, kind: input, shape index: {}]
  %s3 = inlined_call_operand.vmem [shape: f32[128,8], index: 3, kind: input, shape index: {}]
  %s4 = inlined_call_operand.vmem [shape: f32[3,128], index: 4, kind: input, shape index: {}]
  %s5 = inlined_call_operand.hbm [shape: f32[8,8], index: 5, kind: output, shape index: {}]
  %s6 = sld [smem:[#allocation0]]
  $region34: #{_forward.1} parent=0
    _
  %s8 = ssub.s32 1, %s6
  %s9 = scalar_select 0, %s8, %s6
  $region1: #{_forward.1} parent=0
    #allocation2 [shape = 'u8[8192]{0}', space=vmem, size = 0x2000, scoped, tag = 'input window, operand 1, single buffered']
    #allocation3 [shape = 's32[1]{0}', space=sflag, size = 0x4, scoped, tag = 'scoped memory for _forward.1']
    #allocation4 [shape = 's32[1]{0}', space=sflag, size = 0x4, scoped, tag = 'scoped memory for _forward.1']
    #allocation5 [shape = 'u8[4096]{0}', space=vmem, size = 0x1000, scoped, tag = 'output window, operand 0, single buffered']
    %10 = vsyncpa [#allocation3], 0
    %11 = vsyncpa [#allocation4], 0
    // Predicated region
    $region2: #{_forward.1} parent=1 // pred_check
      _
    $region3: #{_forward.1} parent=1 // pred_check_branch
      %13 = sbr.rel (0) target = $region5
    $region4: #{_forward.1} parent=1 // pred_region
      _
    $region5: #{_forward.1} parent=1 // pred_fallthru
      _
    // Predicated region
    $region6: #{_forward.1} parent=1 // pred_check
      _
    $region7: #{_forward.1} parent=1 // pred_check_branch
      %15 = sbr.rel (0) target = $region9
    $region8: #{_forward.1} parent=1 // pred_region
      %s17 = ssub.s32 256, 256
      %18 = vsyncadd [#allocation3], %s17
      %s19 = sshll.u32 [#allocation2], 4
      %s20 = int_to_ptr.vmem [resolvable:$true] %s19
      %25 = dma.hbm_to_vmem [thread:$0]  %s1, 256, %s20, [#allocation3], 128, 128, 8
    $region9: #{_forward.1} parent=1 // pred_fallthru
      _
    // Predicated region
    $region10: #{_forward.1} parent=1 // pred_check
      _
    $region11: #{_forward.1} parent=1 // pred_check_branch
      %27 = sbr.rel (0) target = $region13
    $region12: #{_forward.1} parent=1 // pred_region
      _
    $region13: #{_forward.1} parent=1 // pred_fallthru
      _
    // Predicated region
    $region14: #{_forward.1} parent=1 // pred_check
      _
    $region15: #{_forward.1} parent=1 // pred_check_branch
      %29 = sbr.rel (0) target = $region17
    $region16: #{_forward.1} parent=1 // pred_region
      _
    $region17: #{_forward.1} parent=1 // pred_fallthru
      _
    // Predicated region
    $region18: #{_forward.1} parent=1 // pred_check
      _
    $region19: #{_forward.1} parent=1 // pred_check_branch
      %31 = sbr.rel (0) target = $region21
    $region20: #{_forward.1} parent=1 // pred_region
      _
    $region21: #{_forward.1} parent=1 // pred_fallthru
      _
    // Predicated region
    $region22: #{_forward.1} parent=1 // pred_check
      _
    $region23: #{_forward.1} parent=1 // pred_check_branch
      %33 = sbr.rel (0) target = $region25
    $region24: #{_forward.1} parent=1 // pred_region
      %34 = dma.done [#allocation3], 256
    $region25: #{_forward.1} parent=1 // pred_fallthru
      _
    %v35 = vld [vmem:[%s0] sm:$0xff]
    %v36 = vld [vmem:[#allocation2] sm:$0xff]
    %v37 = vld [vmem:[#allocation2 + $0x8] sm:$0xff]
    %v38 = vld [vmem:[%s4] sm:$0x1]
    %v39 = vlaneseq
    %v40 = vshrl.u32 %v39, 7
    %v41 = vsub.s32 0, %v40
    %v42 = vrot.slane %v38, %v41
    %vm43 = vcmask 130048
    %v45 = vsel %vm43, %v35, 0
    %47 = vmatprep.subr.mxu0 0.0
    %48 = vmatpush1.msra.mxu0 0.0
    %49 = vmatprep.subr.mxu0 0.0
    %50 = vmatpush1.msra.mxu0 0.0
    %51 = vmatprep.subr.mxu0 0.0
    %52 = vmatpush1.msra.mxu0 0.0
    %53 = vmatprep.subr.mxu0 0.0
    %54 = vmatpush1.msra.mxu0 0.0
    %55 = vmatprep.subr.mxu0 0.0
    %56 = vmatpush1.msra.mxu0 0.0
    %57 = vmatprep.subr.mxu0 0.0
    %58 = vmatpush1.msra.mxu0 0.0
    %59 = vmatprep.subr.mxu0 0.0
    %60 = vmatpush1.msra.mxu0 0.0
    %61 = vmatprep.subr.mxu0 0.0
    %62 = vmatpush1.msra.mxu0 0.0
    %63 = vmatprep.subr.mxu0 0.0
    %64 = vmatpush1.msra.mxu0 0.0
    %65 = vmatprep.subr.mxu0 0.0
    %66 = vmatpush1.msra.mxu0 0.0
    %67 = vmatprep.subr.mxu0 0.0
    %68 = vmatpush1.msra.mxu0 0.0
    %69 = vmatprep.subr.mxu0 0.0
    %70 = vmatpush1.msra.mxu0 0.0
    %71 = vmatprep.subr.mxu0 0.0
    %72 = vmatpush1.msra.mxu0 0.0
    %73 = vmatprep.subr.mxu0 0.0
    %74 = vmatpush1.msra.mxu0 0.0
    %75 = vmatprep.subr.mxu0 0.0
    %76 = vmatpush1.msra.mxu0 %v37
    %77 = vmatprep.subr.mxu0 0.0
    %78 = vmatpush1.msra.mxu0 %v36
    %79 = vmatprep.subr.mxu0 0.0
    %80 = vmatpush2.msra.mxu0 0.0
    %81 = vmatprep.subr.mxu0 0.0
    %82 = vmatpush2.msra.mxu0 0.0
    %83 = vmatprep.subr.mxu0 0.0
    %84 = vmatpush2.msra.mxu0 0.0
    %85 = vmatprep.subr.mxu0 0.0
    %86 = vmatpush2.msra.mxu0 0.0
    %87 = vmatprep.subr.mxu0 0.0
    %88 = vmatpush2.msra.mxu0 0.0
    %89 = vmatprep.subr.mxu0 0.0
    %90 = vmatpush2.msra.mxu0 0.0
    %91 = vmatprep.subr.mxu0 0.0
    %92 = vmatpush2.msra.mxu0 0.0
    %93 = vmatprep.subr.mxu0 0.0
    %94 = vmatpush2.msra.mxu0 0.0
    %95 = vmatprep.subr.mxu0 0.0
    %96 = vmatpush2.msra.mxu0 0.0
    %97 = vmatprep.subr.mxu0 0.0
    %98 = vmatpush2.msra.mxu0 0.0
    %99 = vmatprep.subr.mxu0 0.0
    %100 = vmatpush2.msra.mxu0 0.0
    %101 = vmatprep.subr.mxu0 0.0
    %102 = vmatpush2.msra.mxu0 0.0
    %103 = vmatprep.subr.mxu0 0.0
    %104 = vmatpush2.msra.mxu0 0.0
    %105 = vmatprep.subr.mxu0 0.0
    %106 = vmatpush2.msra.mxu0 0.0
    %107 = vmatprep.subr.mxu0 0.0
    %108 = vmatpush2.msra.mxu0 0.0
    %109 = vmatprep.subr.mxu0 0.0
    %110 = vmatpush2.msra.mxu0 0.0
    %111 = vmatprep.mubr.f32.mxu0 0.0
    %112 = vmatmul.mubr.f32.gmra.mxu0 %v45
    %v113 = vpop.f32.mrf.mxu0
    %v114 = vadd.f32 %v42, %v113
    %v115 = vpop.f32.mrf.mxu0
    %116 = vdwg.mxu0
    %vm117 = vcmp.gt.f32.partialorder %v114, 0.0
    %v118 = vmul.f32 %v114, 0.01
    %v119 = vsel %vm117, %v114, %v118
    %v120 = vld [vmem:[%s2] sm:$0xff]
    %v121 = vld [vmem:[%s2 + $0x8] sm:$0xff]
    %v122 = vld [vmem:[%s2 + $0x10] sm:$0xff]
    %v123 = vld [vmem:[%s2 + $0x18] sm:$0xff]
    %v124 = vld [vmem:[%s2 + $0x20] sm:$0xff]
    %v125 = vld [vmem:[%s2 + $0x28] sm:$0xff]
    %v126 = vld [vmem:[%s2 + $0x30] sm:$0xff]
    %v127 = vld [vmem:[%s2 + $0x38] sm:$0xff]
    %v128 = vld [vmem:[%s2 + $0x40] sm:$0xff]
    %v129 = vld [vmem:[%s2 + $0x48] sm:$0xff]
    %v130 = vld [vmem:[%s2 + $0x50] sm:$0xff]
    %v131 = vld [vmem:[%s2 + $0x58] sm:$0xff]
    %v132 = vld [vmem:[%s2 + $0x60] sm:$0xff]
    %v133 = vld [vmem:[%s2 + $0x68] sm:$0xff]
    %v134 = vld [vmem:[%s2 + $0x70] sm:$0xff]
    %v135 = vld [vmem:[%s2 + $0x78] sm:$0xff]
    %v136 = vld [vmem:[%s4 + $0x1] sm:$0x1]
    %v137 = vlaneseq
    %v138 = vshrl.u32 %v137, 7
    %v139 = vsub.s32 0, %v138
    %v140 = vrot.slane %v136, %v139
    %141 = vmatprep.subr.mxu0 0.0
    %142 = vmatpush1.msra.mxu0 %v135
    %143 = vmatprep.subr.mxu0 0.0
    %144 = vmatpush1.msra.mxu0 %v134
    %145 = vmatprep.subr.mxu0 0.0
    %146 = vmatpush1.msra.mxu0 %v133
    %147 = vmatprep.subr.mxu0 0.0
    %148 = vmatpush1.msra.mxu0 %v132
    %149 = vmatprep.subr.mxu0 0.0
    %150 = vmatpush1.msra.mxu0 %v131
    %151 = vmatprep.subr.mxu0 0.0
    %152 = vmatpush1.msra.mxu0 %v130
    %153 = vmatprep.subr.mxu0 0.0
    %154 = vmatpush1.msra.mxu0 %v129
    %155 = vmatprep.subr.mxu0 0.0
    %156 = vmatpush1.msra.mxu0 %v128
    %157 = vmatprep.subr.mxu0 0.0
    %158 = vmatpush1.msra.mxu0 %v127
    %159 = vmatprep.subr.mxu0 0.0
    %160 = vmatpush1.msra.mxu0 %v126
    %161 = vmatprep.subr.mxu0 0.0
    %162 = vmatpush1.msra.mxu0 %v125
    %163 = vmatprep.subr.mxu0 0.0
    %164 = vmatpush1.msra.mxu0 %v124
    %165 = vmatprep.subr.mxu0 0.0
    %166 = vmatpush1.msra.mxu0 %v123
    %167 = vmatprep.subr.mxu0 0.0
    %168 = vmatpush1.msra.mxu0 %v122
    %169 = vmatprep.subr.mxu0 0.0
    %170 = vmatpush1.msra.mxu0 %v121
    %171 = vmatprep.subr.mxu0 0.0
    %172 = vmatpush1.msra.mxu0 %v120
    %173 = vmatprep.subr.mxu0 0.0
    %174 = vmatpush2.msra.mxu0 0.0
    %175 = vmatprep.subr.mxu0 0.0
    %176 = vmatpush2.msra.mxu0 0.0
    %177 = vmatprep.subr.mxu0 0.0
    %178 = vmatpush2.msra.mxu0 0.0
    %179 = vmatprep.subr.mxu0 0.0
    %180 = vmatpush2.msra.mxu0 0.0
    %181 = vmatprep.subr.mxu0 0.0
    %182 = vmatpush2.msra.mxu0 0.0
    %183 = vmatprep.subr.mxu0 0.0
    %184 = vmatpush2.msra.mxu0 0.0
    %185 = vmatprep.subr.mxu0 0.0
    %186 = vmatpush2.msra.mxu0 0.0
    %187 = vmatprep.subr.mxu0 0.0
    %188 = vmatpush2.msra.mxu0 0.0
    %189 = vmatprep.subr.mxu0 0.0
    %190 = vmatpush2.msra.mxu0 0.0
    %191 = vmatprep.subr.mxu0 0.0
    %192 = vmatpush2.msra.mxu0 0.0
    %193 = vmatprep.subr.mxu0 0.0
    %194 = vmatpush2.msra.mxu0 0.0
    %195 = vmatprep.subr.mxu0 0.0
    %196 = vmatpush2.msra.mxu0 0.0
    %197 = vmatprep.subr.mxu0 0.0
    %198 = vmatpush2.msra.mxu0 0.0
    %199 = vmatprep.subr.mxu0 0.0
    %200 = vmatpush2.msra.mxu0 0.0
    %201 = vmatprep.subr.mxu0 0.0
    %202 = vmatpush2.msra.mxu0 0.0
    %203 = vmatprep.subr.mxu0 0.0
    %204 = vmatpush2.msra.mxu0 0.0
    %205 = vmatprep.mubr.f32.mxu0 0.0
    %206 = vmatmul.mubr.f32.gmra.mxu0 %v119
    %v207 = vpop.f32.mrf.mxu0
    %v208 = vadd.f32 %v140, %v207
    %v209 = vpop.f32.mrf.mxu0
    %210 = vdwg.mxu0
    %vm211 = vcmp.gt.f32.partialorder %v208, 0.0
    %v212 = vmul.f32 %v208, 0.01
    %v213 = vsel %vm211, %v208, %v212
    %v214 = vld [vmem:[%s3] sm:$0xff]
    %v215 = vld [vmem:[%s3 + $0x8] sm:$0xff]
    %v216 = vld [vmem:[%s3 + $0x10] sm:$0xff]
    %v217 = vld [vmem:[%s3 + $0x18] sm:$0xff]
    %v218 = vld [vmem:[%s3 + $0x20] sm:$0xff]
    %v219 = vld [vmem:[%s3 + $0x28] sm:$0xff]
    %v220 = vld [vmem:[%s3 + $0x30] sm:$0xff]
    %v221 = vld [vmem:[%s3 + $0x38] sm:$0xff]
    %v222 = vld [vmem:[%s3 + $0x40] sm:$0xff]
    %v223 = vld [vmem:[%s3 + $0x48] sm:$0xff]
    %v224 = vld [vmem:[%s3 + $0x50] sm:$0xff]
    %v225 = vld [vmem:[%s3 + $0x58] sm:$0xff]
    %v226 = vld [vmem:[%s3 + $0x60] sm:$0xff]
    %v227 = vld [vmem:[%s3 + $0x68] sm:$0xff]
    %v228 = vld [vmem:[%s3 + $0x70] sm:$0xff]
    %v229 = vld [vmem:[%s3 + $0x78] sm:$0xff]
    %v230 = vld [vmem:[%s4 + $0x2] sm:$0x1]
    %v231 = vlaneseq
    %v232 = vshrl.u32 %v231, 7
    %v233 = vsub.s32 0, %v232
    %v234 = vrot.slane %v230, %v233
    %235 = vmatprep.subr.mxu0 0.0
    %236 = vmatpush1.msra.mxu0 %v229
    %237 = vmatprep.subr.mxu0 0.0
    %238 = vmatpush1.msra.mxu0 %v228
    %239 = vmatprep.subr.mxu0 0.0
    %240 = vmatpush1.msra.mxu0 %v227
    %241 = vmatprep.subr.mxu0 0.0
    %242 = vmatpush1.msra.mxu0 %v226
    %243 = vmatprep.subr.mxu0 0.0
    %244 = vmatpush1.msra.mxu0 %v225
    %245 = vmatprep.subr.mxu0 0.0
    %246 = vmatpush1.msra.mxu0 %v224
    %247 = vmatprep.subr.mxu0 0.0
    %248 = vmatpush1.msra.mxu0 %v223
    %249 = vmatprep.subr.mxu0 0.0
    %250 = vmatpush1.msra.mxu0 %v222
    %251 = vmatprep.subr.mxu0 0.0
    %252 = vmatpush1.msra.mxu0 %v221
    %253 = vmatprep.subr.mxu0 0.0
    %254 = vmatpush1.msra.mxu0 %v220
    %255 = vmatprep.subr.mxu0 0.0
    %256 = vmatpush1.msra.mxu0 %v219
    %257 = vmatprep.subr.mxu0 0.0
    %258 = vmatpush1.msra.mxu0 %v218
    %259 = vmatprep.subr.mxu0 0.0
    %260 = vmatpush1.msra.mxu0 %v217
    %261 = vmatprep.subr.mxu0 0.0
    %262 = vmatpush1.msra.mxu0 %v216
    %263 = vmatprep.subr.mxu0 0.0
    %264 = vmatpush1.msra.mxu0 %v215
    %265 = vmatprep.subr.mxu0 0.0
    %266 = vmatpush1.msra.mxu0 %v214
    %267 = vmatprep.subr.mxu0 0.0
    %268 = vmatpush2.msra.mxu0 0.0
    %269 = vmatprep.subr.mxu0 0.0
    %270 = vmatpush2.msra.mxu0 0.0
    %271 = vmatprep.subr.mxu0 0.0
    %272 = vmatpush2.msra.mxu0 0.0
    %273 = vmatprep.subr.mxu0 0.0
    %274 = vmatpush2.msra.mxu0 0.0
    %275 = vmatprep.subr.mxu0 0.0
    %276 = vmatpush2.msra.mxu0 0.0
    %277 = vmatprep.subr.mxu0 0.0
    %278 = vmatpush2.msra.mxu0 0.0
    %279 = vmatprep.subr.mxu0 0.0
    %280 = vmatpush2.msra.mxu0 0.0
    %281 = vmatprep.subr.mxu0 0.0
    %282 = vmatpush2.msra.mxu0 0.0
    %283 = vmatprep.subr.mxu0 0.0
    %284 = vmatpush2.msra.mxu0 0.0
    %285 = vmatprep.subr.mxu0 0.0
    %286 = vmatpush2.msra.mxu0 0.0
    %287 = vmatprep.subr.mxu0 0.0
    %288 = vmatpush2.msra.mxu0 0.0
    %289 = vmatprep.subr.mxu0 0.0
    %290 = vmatpush2.msra.mxu0 0.0
    %291 = vmatprep.subr.mxu0 0.0
    %292 = vmatpush2.msra.mxu0 0.0
    %293 = vmatprep.subr.mxu0 0.0
    %294 = vmatpush2.msra.mxu0 0.0
    %295 = vmatprep.subr.mxu0 0.0
    %296 = vmatpush2.msra.mxu0 0.0
    %297 = vmatprep.subr.mxu0 0.0
    %298 = vmatpush2.msra.mxu0 0.0
    %299 = vmatprep.mubr.f32.mxu0 0.0
    %300 = vmatmul.mubr.f32.gmra.mxu0 %v213
    %v301 = vpop.f32.mrf.mxu0
    %v302 = vadd.f32 %v234, %v301
    %v303 = vpop.f32.mrf.mxu0
    %304 = vdwg.mxu0
    %vm305 = vcmp.gt.f32.partialorder %v302, 0.0
    %v306 = vmul.f32 %v302, 0.01
    %v307 = vsel %vm305, %v302, %v306
    %vm308 = vcmask 64512
    %309 = vst.msk [vmem:[#allocation5] sm:$0xff] %vm308, %v307
    // Predicated region
    $region26: #{_forward.1} parent=1 // pred_check
      _
    $region27: #{_forward.1} parent=1 // pred_check_branch
      %311 = sbr.rel (0) target = $region29
    $region28: #{_forward.1} parent=1 // pred_region
      %s313 = ssub.s32 128, 128
      %314 = vsyncadd [#allocation4], %s313
      %s316 = sshll.u32 [#allocation5], 4
      %s317 = int_to_ptr.vmem [resolvable:$true] %s316
      %319 = dma.vmem_to_hbm [thread:$0]  %s317, 128, %s5, [#allocation4]
    $region29: #{_forward.1} parent=1 // pred_fallthru
      _
    // Predicated region
    $region30: #{_forward.1} parent=1 // pred_check
      _
    $region31: #{_forward.1} parent=1 // pred_check_branch
      %321 = sbr.rel (0) target = $region33
    $region32: #{_forward.1} parent=1 // pred_region
      %322 = dma.done [#allocation4], 128
    $region33: #{_forward.1} parent=1 // pred_fallthru
      _
    %323 = vsyncpa [#allocation3], 1
    %324 = vsyncpa [#allocation4], 1

</llo_original>
